<compile_context>
chip_gen: v7x
topology: tpu7x:2x2x1
jax: 0.10.0
libtpu: 0.0.40
codegen_flags: <defaults>
</compile_context>

<pallas_src>
import functools

import jax
import jax.numpy as jnp
from jax import lax
from jax.experimental import pallas as pl
from jax.experimental.pallas import tpu as pltpu


# ----------------------------- kernel ---------------------------------------


def _mlp_kernel(x_ref, w1_ref, b1_ref, w2_ref, b2_ref, w3t_ref, b3_ref, o_ref):
    # x_ref: (tile_b, D) f32 (cast to bf16 in VMEM); weights bf16; biases f32.
    # Layer 1: Linear(D->H) + ReLU   (Dropout -> identity in eval mode)
    x = x_ref[...].astype(jnp.bfloat16)
    h = jnp.dot(x, w1_ref[...], preferred_element_type=jnp.float32)
    h = jnp.maximum(h + b1_ref[...], 0.0)
    # Layer 2: Linear(H->H) + ReLU   (Dropout -> identity in eval mode)
    h = jnp.dot(h.astype(jnp.bfloat16), w2_ref[...], preferred_element_type=jnp.float32)
    h = jnp.maximum(h + b2_ref[...], 0.0)
    # Layer 3: contract w3^T (1, H) with h (tile_b, H) over H so the result is the
    # lane-dense row (1, tile_b) rather than a width-1 masked-store column.
    out = lax.dot_general(
        w3t_ref[...], h.astype(jnp.bfloat16),
        dimension_numbers=(((1,), (1,)), ((), ())),
        preferred_element_type=jnp.float32,
    )
    o_ref[...] = (out + b3_ref[0]).astype(o_ref.dtype)


# ------------------- one-time capability probe for Buffered(1) ---------------


def _probe_kernel(c_ref, x_ref, o_ref):
    o_ref[...] = x_ref[...] + c_ref[...]


@functools.cache
def _single_buffer_supported() -> bool:
    """One-time probe: does this Pallas build accept pipeline_mode=pl.Buffered(1)?"""
    try:
        c = jnp.zeros((8, 128), jnp.float32)
        x = jnp.zeros((16, 128), jnp.float32)
        out = pl.pallas_call(
            _probe_kernel,
            out_shape=jax.ShapeDtypeStruct((16, 128), jnp.float32),
            grid=(2,),
            in_specs=[
                pl.BlockSpec((8, 128), lambda i: (0, 0), pipeline_mode=pl.Buffered(1)),
                pl.BlockSpec((8, 128), lambda i: (i, 0)),
            ],
            out_specs=pl.BlockSpec((8, 128), lambda i: (i, 0)),
        )(c, x)
        jax.block_until_ready(out)
        return True
    except Exception:
        return False


# ----------------------------- wrapper ---------------------------------------


def prepare_params(w1, b1, w2, b2, w3, b3):
    """One-time weight quantization / layout prep (hoisted out of the per-call path).

    w_i: [in, out] f32, b_i: [1, out] f32. Matmul operands are stored bf16 (halves
    weight HBM/VMEM traffic), biases stay f32. Accumulation is f32 in-kernel.
    """
    h = w1.shape[1]
    return dict(
        w1=jnp.asarray(w1, jnp.bfloat16),                       # (D, H)
        b1=jnp.asarray(b1, jnp.float32).reshape(1, h),          # (1, H)
        w2=jnp.asarray(w2, jnp.bfloat16),                       # (H, H)
        b2=jnp.asarray(b2, jnp.float32).reshape(1, h),          # (1, H)
        w3t=jnp.asarray(w3, jnp.float32).reshape(1, h).astype(jnp.bfloat16),  # (1, H)
        b3=jnp.asarray(b3, jnp.float32).reshape(1),              # (1,) scalar in SMEM
    )


def _pick_tile_b(batch: int, cap: int = 1024) -> int:
    """Batch tile: >=256 rows (full MXU row passes, amortizes ~0.35us/step overhead);
    >=2 tiles when the batch allows (v7x has 2 TensorCores); capped at 1024 rows so
    the (tile_b, H) f32 activations stay well inside v7x's 64 MiB VMEM."""
    if batch <= 256:
        return 256
    per_core = -(-batch // 2)                  # aim for at least two grid steps
    return int(min(-(-per_core // 256) * 256, cap))


@functools.partial(jax.jit, static_argnames=("tile_b", "single_buffer_w2"))
def _forward_impl(x, w1, b1, w2, b2, w3t, b3, *, tile_b, single_buffer_w2):
    B, D = x.shape
    H = w1.shape[1]
    num_tiles = pl.cdiv(B, tile_b)

    # w2 is the only resident block large enough for single-buffering to matter
    # (H*H*2 bytes). Bias/(1,H) blocks are noise; leave them default.
    if single_buffer_w2:
        w2_spec = pl.BlockSpec((H, H), lambda i: (0, 0), pipeline_mode=pl.Buffered(1))
    else:
        w2_spec = pl.BlockSpec((H, H), lambda i: (0, 0))

    flops = 2 * B * (D * H + H * H + H)
    bytes_accessed = (B * D * 4                     # x streamed once (f32)
                      + (D * H + H * H + H) * 2     # bf16 weights, read once
                      + (2 * H + 1) * 4             # biases
                      + B * 4)                      # output

    out = pl.pallas_call(
        _mlp_kernel,
        out_shape=jax.ShapeDtypeStruct((1, num_tiles * tile_b), jnp.float32),
        grid=(num_tiles,),
        in_specs=[
            pl.BlockSpec((tile_b, D), lambda i: (i, 0)),           # x batch tile (ragged last block OK)
            pl.BlockSpec((D, H), lambda i: (0, 0)),                # w1 (resident)
            pl.BlockSpec((1, H), lambda i: (0, 0)),                # b1
            w2_spec,                                               # w2 (resident, single-buffered)
            pl.BlockSpec((1, H), lambda i: (0, 0)),                # b2
            pl.BlockSpec((1, H), lambda i: (0, 0)),                # w3^T
            pl.BlockSpec(memory_space=pltpu.MemorySpace.SMEM),     # b3 scalar
        ],
        out_specs=pl.BlockSpec((1, tile_b), lambda i: (0, i)),     # lane-dense row blocks
        compiler_params=pltpu.CompilerParams(
            dimension_semantics=("parallel",),       # batch tiles shard across TCs (v7x)
            vmem_limit_bytes=48 * 1024 * 1024,       # under v7x 64 MiB/TC; ample on v5e/v6e
        ),
        cost_estimate=pl.CostEstimate(
            flops=flops, transcendentals=0, bytes_accessed=bytes_accessed),
    )(x, w1, b1, w2, b2, w3t, b3)

    # (1, num_tiles*tile_b) -> (B, 1); padded tail columns (garbage rows) are dropped.
    return out.reshape(num_tiles * tile_b, 1)[:B]


def docking_oracle_forward(x, params, *, tile_b=None):
    """Predict docking scores. x: [B, latent_dim] f32; params from prepare_params().
    Returns [B, 1] f32 (eval-mode forward of DockingOracle.network)."""
    if tile_b is None:
        tile_b = _pick_tile_b(x.shape[0])
    return _forward_impl(
        x, params["w1"], params["b1"], params["w2"], params["b2"],
        params["w3t"], params["b3"],
        tile_b=tile_b, single_buffer_w2=_single_buffer_supported())


# ----------------------------- references / demo -----------------------------


def _init_linear(key, fan_in, fan_out):
    """Deterministic init mirroring torch.nn.Linear default (U[-1/sqrt(in), 1/sqrt(in)])."""
    kw, kb = jax.random.split(key)
    bound = 1.0 / jnp.sqrt(jnp.float32(fan_in))
    w = jax.random.uniform(kw, (fan_in, fan_out), jnp.float32, -bound, bound)
    b = jax.random.uniform(kb, (1, fan_out), jnp.float32, -bound, bound)
    return w, b


def _reference_quantized(x, w1, b1, w2, b2, w3, b3):
    """Pure-JAX reference with the same bf16-operand / f32-accumulate quantization."""
    bf = jnp.bfloat16
    h = jnp.dot(x.astype(bf), w1.astype(bf), preferred_element_type=jnp.float32) + b1
    h = jnp.maximum(h, 0.0)
    h = jnp.dot(h.astype(bf), w2.astype(bf), preferred_element_type=jnp.float32) + b2
    h = jnp.maximum(h, 0.0)
    return jnp.dot(h.astype(bf), w3.astype(bf), preferred_element_type=jnp.float32) + b3


def _reference_f32(x, w1, b1, w2, b2, w3, b3):
    """Full-f32 reference (PyTorch semantics); kernel drifts ~1e-2..1e-3 due to bf16 operands."""
    h = jnp.maximum(jnp.dot(x, w1, precision=lax.Precision.HIGHEST) + b1, 0.0)
    h = jnp.maximum(jnp.dot(h, w2, precision=lax.Precision.HIGHEST) + b2, 0.0)
    return jnp.dot(h, w3, precision=lax.Precision.HIGHEST) + b3


if __name__ == "__main__":
    # Small shapes consistent with the module (hidden_dim shrunk 1024 -> 128 for demo).
    # B=300 is deliberately NOT a multiple of tile_b: exercises the cdiv grid with a
    # ragged last block (no wrapper pad) and gives 2 batch tiles (one per v7x TC).
    B, LATENT_DIM, HIDDEN = 300, 32, 128

    key = jax.random.PRNGKey(0)
    kx, k1, k2, k3 = jax.random.split(key, 4)

    x = jax.random.normal(kx, (B, LATENT_DIM), jnp.float32)
    w1, b1 = _init_linear(k1, LATENT_DIM, HIDDEN)
    w2, b2 = _init_linear(k2, HIDDEN, HIDDEN)
    w3, b3 = _init_linear(k3, HIDDEN, 1)

    params = prepare_params(w1, b1, w2, b2, w3, b3)   # one-time quantization (hoisted)

    out = docking_oracle_forward(x, params)
    out = jax.block_until_ready(out)
    assert out.shape == (B, 1)

    ref_q = _reference_quantized(x, w1, b1, w2, b2, w3, b3)
    assert jnp.allclose(out, ref_q, atol=1e-2, rtol=1e-2), "mismatch vs quantized reference"

    # Loose sanity bound vs true f32 semantics (documents expected bf16-operand drift).
    ref_f = _reference_f32(x, w1, b1, w2, b2, w3, b3)
    assert float(jnp.max(jnp.abs(out - ref_f))) < 0.1, "bf16 drift vs f32 reference too large"

    print("KERNEL_OK")
</pallas_src>

<mosaic_0001>
module attributes {stable_mosaic.version = 11 : i64} {
  func.func @_probe_kernel(%arg0: i32, %arg1: memref<8x128xf32, #tpu.memory_space<vmem>>, %arg2: memref<8x128xf32, #tpu.memory_space<vmem>>, %arg3: memref<8x128xf32, #tpu.memory_space<vmem>>) attributes {dimension_semantics = [#tpu.dimension_semantics<arbitrary>], iteration_bounds = array<i64: 2>, scalar_prefetch = 0 : i64, scratch_operands = 0 : i64, tpu.core_type = #tpu.core_type<tc>, window_params = [{pipeline_mode = #tpu.pipeline_mode<synchronous>, transform_indices = @transform_0, window_bounds = array<i64: 8, 128>}, {transform_indices = @transform_1, window_bounds = array<i64: 8, 128>}, {transform_indices = @transform_2, window_bounds = array<i64: 8, 128>}]} {
    %c0 = arith.constant 0 : index
    %c0_0 = arith.constant 0 : index
    %0 = vector.load %arg2[%c0, %c0_0] : memref<8x128xf32, #tpu.memory_space<vmem>>, vector<8x128xf32>
    %c0_1 = arith.constant 0 : index
    %c0_2 = arith.constant 0 : index
    %1 = vector.load %arg1[%c0_1, %c0_2] : memref<8x128xf32, #tpu.memory_space<vmem>>, vector<8x128xf32>
    %2 = arith.addf %0, %1 : vector<8x128xf32>
    %c0_3 = arith.constant 0 : index
    %c0_4 = arith.constant 0 : index
    %3 = vector.load %arg3[%c0_3, %c0_4] : memref<8x128xf32, #tpu.memory_space<vmem>>, vector<8x128xf32>
    tpu.vector_store %arg3[%c0_3, %c0_4], %2 {strides = array<i32>} : memref<8x128xf32, #tpu.memory_space<vmem>>, vector<8x128xf32>,
    return
  }
  func.func @transform_0(%arg0: i32) -> (i32, i32) {
    %c0_i32 = arith.constant 0 : i32
    %c0_i32_0 = arith.constant 0 : i32
    %c0_i32_1 = arith.constant 0 : i32
    return %c0_i32, %c0_i32_0 : i32, i32
  }
  func.func @transform_1(%arg0: i32) -> (i32, i32) {
    %c0_i32 = arith.constant 0 : i32
    %c0_i32_0 = arith.constant 0 : i32
    return %arg0, %c0_i32 : i32, i32
  }
  func.func @transform_2(%arg0: i32) -> (i32, i32) {
    %c0_i32 = arith.constant 0 : i32
    %c0_i32_0 = arith.constant 0 : i32
    return %arg0, %c0_i32 : i32, i32
  }
}

module attributes {stable_mosaic.version = 11 : i64} {
  func.func @_mlp_kernel(%arg0: i32, %arg1: memref<256x32xf32, #tpu.memory_space<vmem>>, %arg2: memref<32x128xbf16, #tpu.memory_space<vmem>>, %arg3: memref<1x128xf32, #tpu.memory_space<vmem>>, %arg4: memref<128x128xbf16, #tpu.memory_space<vmem>>, %arg5: memref<1x128xf32, #tpu.memory_space<vmem>>, %arg6: memref<1x128xbf16, #tpu.memory_space<vmem>>, %arg7: memref<1xf32, #tpu.memory_space<smem>>, %arg8: memref<1x256xf32, #tpu.memory_space<vmem>>) attributes {dimension_semantics = [#tpu.dimension_semantics<parallel>], iteration_bounds = array<i64: 2>, scalar_prefetch = 0 : i64, scratch_operands = 0 : i64, tpu.core_type = #tpu.core_type<tc>, window_params = [{transform_indices = @transform_0, window_bounds = array<i64: 256, 32>}, {pipeline_mode = #tpu.pipeline_mode<synchronous>, transform_indices = @transform_1, window_bounds = array<i64: 32, 128>}, {pipeline_mode = #tpu.pipeline_mode<synchronous>, transform_indices = @transform_2, window_bounds = array<i64: 1, 128>}, {pipeline_mode = #tpu.pipeline_mode<synchronous>, transform_indices = @transform_3, window_bounds = array<i64: 128, 128>}, {pipeline_mode = #tpu.pipeline_mode<synchronous>, transform_indices = @transform_4, window_bounds = array<i64: 1, 128>}, {pipeline_mode = #tpu.pipeline_mode<synchronous>, transform_indices = @transform_5, window_bounds = array<i64: 1, 128>}, {transform_indices = @transform_6, window_bounds = array<i64: 1>}, {transform_indices = @transform_7, window_bounds = array<i64: 1, 256>}]} {
    %c0 = arith.constant 0 : index
    %c0_0 = arith.constant 0 : index
    %0 = vector.load %arg1[%c0, %c0_0] : memref<256x32xf32, #tpu.memory_space<vmem>>, vector<256x32xf32>
    %1 = arith.truncf %0 : vector<256x32xf32> to vector<256x32xbf16>
    %c0_1 = arith.constant 0 : index
    %c0_2 = arith.constant 0 : index
    %2 = vector.load %arg2[%c0_1, %c0_2] : memref<32x128xbf16, #tpu.memory_space<vmem>>, vector<32x128xbf16>
    %cst = arith.constant dense<0.000000e+00> : vector<256x128xf32>
    %3 = tpu.matmul %1, %2, %cst {dimension_numbers = #tpu.dot_dimension_numbers<[1], [0], [0], [1], [0, 0, 1, 1], [], []>} : vector<256x32xbf16>, vector<32x128xbf16>, vector<256x128xf32> -> vector<256x128xf32>
    %c0_3 = arith.constant 0 : index
    %c0_4 = arith.constant 0 : index
    %4 = vector.load %arg3[%c0_3, %c0_4] : memref<1x128xf32, #tpu.memory_space<vmem>>, vector<1x128xf32>
    %5 = vector.broadcast %4 : vector<1x128xf32> to vector<256x128xf32>
    %6 = arith.addf %3, %5 : vector<256x128xf32>
    %cst_5 = arith.constant 0.000000e+00 : f32
    %7 = vector.broadcast %cst_5 : f32 to vector<256x128xf32>
    %8 = arith.maximumf %6, %7 : vector<256x128xf32>
    %9 = arith.truncf %8 : vector<256x128xf32> to vector<256x128xbf16>
    %c0_6 = arith.constant 0 : index
    %c0_7 = arith.constant 0 : index
    %10 = vector.load %arg4[%c0_6, %c0_7] : memref<128x128xbf16, #tpu.memory_space<vmem>>, vector<128x128xbf16>
    %cst_8 = arith.constant dense<0.000000e+00> : vector<256x128xf32>
    %11 = tpu.matmul %9, %10, %cst_8 {dimension_numbers = #tpu.dot_dimension_numbers<[1], [0], [0], [1], [0, 0, 1, 1], [], []>} : vector<256x128xbf16>, vector<128x128xbf16>, vector<256x128xf32> -> vector<256x128xf32>
    %c0_9 = arith.constant 0 : index
    %c0_10 = arith.constant 0 : index
    %12 = vector.load %arg5[%c0_9, %c0_10] : memref<1x128xf32, #tpu.memory_space<vmem>>, vector<1x128xf32>
    %13 = vector.broadcast %12 : vector<1x128xf32> to vector<256x128xf32>
    %14 = arith.addf %11, %13 : vector<256x128xf32>
    %cst_11 = arith.constant 0.000000e+00 : f32
    %15 = vector.broadcast %cst_11 : f32 to vector<256x128xf32>
    %16 = arith.maximumf %14, %15 : vector<256x128xf32>
    %c0_12 = arith.constant 0 : index
    %c0_13 = arith.constant 0 : index
    %17 = vector.load %arg6[%c0_12, %c0_13] : memref<1x128xbf16, #tpu.memory_space<vmem>>, vector<1x128xbf16>
    %18 = arith.truncf %16 : vector<256x128xf32> to vector<256x128xbf16>
    %cst_14 = arith.constant dense<0.000000e+00> : vector<1x256xf32>
    %19 = tpu.matmul %17, %18, %cst_14 {dimension_numbers = #tpu.dot_dimension_numbers<[1], [1], [0], [0], [0, 0, 1, 0], [], []>} : vector<1x128xbf16>, vector<256x128xbf16>, vector<1x256xf32> -> vector<1x256xf32>
    %c0_15 = arith.constant 0 : index
    %20 = memref.load %arg7[%c0_15] : memref<1xf32, #tpu.memory_space<smem>>
    %21 = vector.broadcast %20 : f32 to vector<1x256xf32>
    %22 = arith.addf %19, %21 : vector<1x256xf32>
    %c0_16 = arith.constant 0 : index
    %c0_17 = arith.constant 0 : index
    %23 = vector.load %arg8[%c0_16, %c0_17] : memref<1x256xf32, #tpu.memory_space<vmem>>, vector<1x256xf32>
    tpu.vector_store %arg8[%c0_16, %c0_17], %22 {strides = array<i32>} : memref<1x256xf32, #tpu.memory_space<vmem>>, vector<1x256xf32>,
    return
  }
  func.func @transform_0(%arg0: i32) -> (i32, i32) {
    %c0_i32 = arith.constant 0 : i32
    %c0_i32_0 = arith.constant 0 : i32
    return %arg0, %c0_i32 : i32, i32
  }
  func.func @transform_1(%arg0: i32) -> (i32, i32) {
    %c0_i32 = arith.constant 0 : i32
    %c0_i32_0 = arith.constant 0 : i32
    %c0_i32_1 = arith.constant 0 : i32
    return %c0_i32, %c0_i32_0 : i32, i32
  }
  func.func @transform_2(%arg0: i32) -> (i32, i32) {
    %c0_i32 = arith.constant 0 : i32
    %c0_i32_0 = arith.constant 0 : i32
    %c0_i32_1 = arith.constant 0 : i32
    return %c0_i32, %c0_i32_0 : i32, i32
  }
  func.func @transform_3(%arg0: i32) -> (i32, i32) {
    %c0_i32 = arith.constant 0 : i32
    %c0_i32_0 = arith.constant 0 : i32
    %c0_i32_1 = arith.constant 0 : i32
    return %c0_i32, %c0_i32_0 : i32, i32
  }
  func.func @transform_4(%arg0: i32) -> (i32, i32) {
    %c0_i32 = arith.constant 0 : i32
    %c0_i32_0 = arith.constant 0 : i32
    %c0_i32_1 = arith.constant 0 : i32
    return %c0_i32, %c0_i32_0 : i32, i32
  }
  func.func @transform_5(%arg0: i32) -> (i32, i32) {
    %c0_i32 = arith.constant 0 : i32
    %c0_i32_0 = arith.constant 0 : i32
    %c0_i32_1 = arith.constant 0 : i32
    return %c0_i32, %c0_i32_0 : i32, i32
  }
  func.func @transform_6(%arg0: i32) -> i32 {
    %c0_i32 = arith.constant 0 : i32
    %c0_i32_0 = arith.constant 0 : i32
    return %c0_i32 : i32
  }
  func.func @transform_7(%arg0: i32) -> (i32, i32) {
    %c0_i32 = arith.constant 0 : i32
    %c0_i32_0 = arith.constant 0 : i32
    return %c0_i32, %arg0 : i32, i32
  }
}

</mosaic_0001>

<llo_original>
// kernel: tpu_custom_call.1
$region0: #{tpu_custom_call.1}
  #allocation0 [shape = 'u32[]', space=smem, size = 0x4, offset = 0x4, fixed_abs, tag = 'smem constant byte address 0x4 - core index']
  #allocation1 [shape = 'u32[144,128]{1,0:T(1,128)}', space=vmem, size = 0x12000, scoped, tag = 'internal scratch']
  %s0 = inlined_call_operand.hbm [shape: f32[8,128], index: 0, kind: input, shape index: {}]
  %s1 = inlined_call_operand.hbm [shape: f32[16,128], index: 1, kind: input, shape index: {}]
  %s2 = inlined_call_operand.hbm [shape: f32[16,128], index: 2, kind: output, shape index: {}]
  %s3 = sld [smem:[#allocation0]]
  $region49: #{tpu_custom_call.1} parent=0
    _
  %s5 = ssub.s32 1, %s3
  %s6 = scalar_select 0, %s5, %s3
  $region1: #{tpu_custom_call.1} parent=0
    #allocation2 [shape = 'u8[4096]{0}', space=vmem, size = 0x1000, scoped, tag = 'input window, operand 0, single buffered']
    #allocation3 [shape = 's32[2]{0}', space=sflag, size = 0x8, scoped, tag = 'scoped memory for tpu_custom_call.1']
    #allocation4 [shape = 's32[2]{0}', space=sflag, size = 0x8, scoped, tag = 'scoped memory for tpu_custom_call.1']
    #allocation5 [shape = 'u8[8192]{0}', space=vmem, size = 0x2000, scoped, tag = 'input window, operand 1']
    #allocation6 [shape = 's32[2]{0}', space=sflag, size = 0x8, scoped, tag = 'scoped memory for tpu_custom_call.1']
    #allocation7 [shape = 'u8[8192]{0}', space=vmem, size = 0x2000, scoped, tag = 'output window, operand 0']
    %7 = vsyncpa [#allocation3], 0
    %8 = vsyncpa [#allocation6], 0
    %s9 = scalar_lea.sflag [#allocation6], 1
    %10 = vsyncpa %s9, 0
    %11 = vsyncpa [#allocation4], 0
    %s12 = scalar_lea.sflag [#allocation4], 1
    %13 = vsyncpa %s12, 0
    loop: start=0, step=1, limit=4
    $region2: #{tpu_custom_call.1} parent=1 // loop_pre_header
      _
    $region3: #{tpu_custom_call.1} parent=1 // loop_header
      %s15 = sphi 0, %s19
      %p16 = scmp.ge.s32.totalorder %s15, 4
      %s23 = sphi 0, %s23
      %s25 = sphi 0, %s23
      %s26 = sphi 0, %s25
      %s40 = sphi 0, %s26
      %s46 = sphi 0, %s48
      %s49 = sphi 0, %s46
      %s50 = sphi 0, %s49
      %s66 = sphi 0, %s50
      %s72 = sphi 0, %s74
      %s75 = sphi 0, %s72
      %s76 = sphi 0, %s75
      %s92 = sphi 0, %s76
    $region4: #{tpu_custom_call.1} parent=1 // loop_header_branch
      %18 = sbr.rel (%p16) target = $region8
    $region5: #{tpu_custom_call.1} parent=1 // loop_body
      %s20 = ssub.s32 %s15, 1
      %s21 = ssub.s32 %s15, 2
      %s22 = sadd.s32 %s15, 1
      %s24 = sadd.s32 %s23, 1
      %p27 = scmp.eq.s32.totalorder %s15, 1
      %p28 = scmp.ne.s32.totalorder %s23, %s25
      %p29 = scmp.eq.s32.totalorder %s15, 0
      %p30 = por %p28, %p29
      %p31 = scmp.ne.s32.totalorder %s23, %s25
      %p32 = scmp.eq.s32.totalorder %s20, 1
      %p33 = por %p31, %p32
      %p34 = scmp.ne.s32.totalorder %s25, %s26
      %p35 = scmp.eq.s32.totalorder %s20, 0
      %p36 = por %p34, %p35
      %p37 = scmp.ne.s32.totalorder %s25, %s26
      %p38 = scmp.eq.s32.totalorder %s21, 1
      %p39 = por %p37, %p38
      %p41 = scmp.ne.s32.totalorder %s26, %s40
      %p42 = scmp.eq.s32.totalorder %s21, 0
      %p43 = por %p41, %p42
      %s44 = ssub.s32 %s15, %s22
      %p45 = scmp.eq.s32.totalorder %s44, 0
      %s47 = sadd.s32 %s46, 1
      %s48 = scalar_select %p45, %s46, %s47
      %p51 = pneg %p45
      %p52 = scmp.eq.s32.totalorder %s15, 1
      %p53 = por %p51, %p52
      %p54 = scmp.ne.s32.totalorder %s46, %s49
      %p55 = scmp.eq.s32.totalorder %s15, 0
      %p56 = por %p54, %p55
      %p57 = scmp.ne.s32.totalorder %s46, %s49
      %p58 = scmp.eq.s32.totalorder %s20, 1
      %p59 = por %p57, %p58
      %p60 = scmp.ne.s32.totalorder %s49, %s50
      %p61 = scmp.eq.s32.totalorder %s20, 0
      %p62 = por %p60, %p61
      %p63 = scmp.ne.s32.totalorder %s49, %s50
      %p64 = scmp.eq.s32.totalorder %s21, 1
      %p65 = por %p63, %p64
      %p67 = scmp.ne.s32.totalorder %s50, %s66
      %p68 = scmp.eq.s32.totalorder %s21, 0
      %p69 = por %p67, %p68
      %s70 = ssub.s32 %s15, %s22
      %p71 = scmp.eq.s32.totalorder %s70, 0
      %s73 = sadd.s32 %s72, 1
      %s74 = scalar_select %p71, %s72, %s73
      %p77 = pneg %p71
      %p78 = scmp.eq.s32.totalorder %s15, 1
      %p79 = por %p77, %p78
      %p80 = scmp.ne.s32.totalorder %s72, %s75
      %p81 = scmp.eq.s32.totalorder %s15, 0
      %p82 = por %p80, %p81
      %p83 = scmp.ne.s32.totalorder %s72, %s75
      %p84 = scmp.eq.s32.totalorder %s20, 1
      %p85 = por %p83, %p84
      %p86 = scmp.ne.s32.totalorder %s75, %s76
      %p87 = scmp.eq.s32.totalorder %s20, 0
      %p88 = por %p86, %p87
      %p89 = scmp.ne.s32.totalorder %s75, %s76
      %p90 = scmp.eq.s32.totalorder %s21, 1
      %p91 = por %p89, %p90
      %p93 = scmp.ne.s32.totalorder %s76, %s92
      %p94 = scmp.eq.s32.totalorder %s21, 0
      %p95 = por %p93, %p94
      %p96 = scmp.le.s32.totalorder 1, %s15
      %p97 = scmp.lt.s32.totalorder %s15, 3
      %p98 = pnand %p96, %p97
      %p99 = pneg %p98
      // Predicated region
      $region9: #{tpu_custom_call.1} parent=5 // pred_check
        _
      $region10: #{tpu_custom_call.1} parent=5 // pred_check_branch
        %101 = sbr.rel (%p98) target = $region12
      $region11: #{tpu_custom_call.1} parent=5 // pred_region
        %s102 = ssub.s32 %s15, 1
        // Predicated region
        $region13: #{tpu_custom_call.1} parent=11 // pred_check
          %p103 = pneg %p36
        $region14: #{tpu_custom_call.1} parent=11 // pred_check_branch
          %105 = sbr.rel (%p103) target = $region16
        $region15: #{tpu_custom_call.1} parent=11 // pred_region
          %s107 = ssub.s32 128, 128
          %108 = vsyncadd [#allocation3], %s107
          %s110 = sshll.u32 [#allocation2], 4
          %s111 = int_to_ptr.vmem [resolvable:$true] %s110
          %113 = dma.hbm_to_vmem [thread:$0]  %s0, 128, %s111, [#allocation3]
        $region16: #{tpu_custom_call.1} parent=11 // pred_fallthru
          _
      $region12: #{tpu_custom_call.1} parent=5 // pred_fallthru
        _
      %p114 = scmp.lt.s32.totalorder %s15, 2
      // Predicated region
      $region17: #{tpu_custom_call.1} parent=5 // pred_check
        %p115 = pneg %p114
      $region18: #{tpu_custom_call.1} parent=5 // pred_check_branch
        %117 = sbr.rel (%p115) target = $region20
      $region19: #{tpu_custom_call.1} parent=5 // pred_region
        // Predicated region
        $region21: #{tpu_custom_call.1} parent=19 // pred_check
          %p118 = pneg %p56
        $region22: #{tpu_custom_call.1} parent=19 // pred_check_branch
          %120 = sbr.rel (%p118) target = $region24
        $region23: #{tpu_custom_call.1} parent=19 // pred_region
          %s121 = sand.u32 %s46, 1
          %s122 = scalar_lea.sflag [#allocation6], %s121
          %s123 = sand.u32 %s46, 1
          %s124 = smul.addr %s123, 8
          %s125 = scalar_lea.vmem [#allocation5], %s124
          %s127 = ssub.s32 128, 128
          %128 = vsyncadd %s122, %s127
          %s129 = smul.addr %s15, 128
          %s130 = scalar_lea.hbm %s1, %s129
          %s132 = sshll.u32 %s125, 4
          %s133 = int_to_ptr.vmem [resolvable:$true] %s132
          %135 = dma.hbm_to_vmem [thread:$0]  %s130, 128, %s133, %s122
        $region24: #{tpu_custom_call.1} parent=19 // pred_fallthru
          _
      $region20: #{tpu_custom_call.1} parent=5 // pred_fallthru
        _
      %p136 = scmp.le.s32.totalorder 1, %s15
      %p137 = scmp.lt.s32.totalorder %s15, 3
      %p138 = pnand %p136, %p137
      %p139 = pneg %p138
      // Predicated region
      $region25: #{tpu_custom_call.1} parent=5 // pred_check
        _
      $region26: #{tpu_custom_call.1} parent=5 // pred_check_branch
        %141 = sbr.rel (%p138) target = $region28
      $region27: #{tpu_custom_call.1} parent=5 // pred_region
        %s142 = ssub.s32 %s15, 1
        // Predicated region
        $region29: #{tpu_custom_call.1} parent=27 // pred_check
          %p143 = pneg %p36
        $region30: #{tpu_custom_call.1} parent=27 // pred_check_branch
          %145 = sbr.rel (%p143) target = $region32
        $region31: #{tpu_custom_call.1} parent=27 // pred_region
          %146 = dma.done [#allocation3], 128
        $region32: #{tpu_custom_call.1} parent=27 // pred_fallthru
          _
        %s147 = sand.u32 %s49, 1
        %s148 = scalar_lea.sflag [#allocation6], %s147
        %s149 = sand.u32 %s49, 1
        %s150 = smul.addr %s149, 8
        %s151 = scalar_lea.vmem [#allocation5], %s150
        // Predicated region
        $region33: #{tpu_custom_call.1} parent=27 // pred_check
          %p152 = pneg %p62
        $region34: #{tpu_custom_call.1} parent=27 // pred_check_branch
          %154 = sbr.rel (%p152) target = $region36
        $region35: #{tpu_custom_call.1} parent=27 // pred_region
          %155 = dma.done %s148, 128
        $region36: #{tpu_custom_call.1} parent=27 // pred_fallthru
          _
        %p156 = pneg %p36
        %p157 = pneg %p33
        %s158 = sand.u32 %s49, 1
        %s159 = scalar_lea.sflag [#allocation6], %s158
        %s160 = sand.u32 %s49, 1
        %s161 = smul.addr %s160, 8
        %s162 = scalar_lea.vmem [#allocation5], %s161
        %p163 = pneg %p62
        %p164 = pneg %p59
        %p165 = pneg %p88
        %p166 = pneg %p85
        %s167 = sand.u32 %s75, 1
        %s168 = scalar_lea.sflag [#allocation4], %s167
        %s169 = sand.u32 %s75, 1
        %s170 = smul.addr %s169, 8
        %s171 = scalar_lea.vmem [#allocation7], %s170
        %v172 = vld [vmem:[%s151] sm:$0xff]
        %v173 = vld [vmem:[#allocation2] sm:$0xff]
        %v174 = vadd.f32 %v172, %v173
        %175 = vst [vmem:[%s171] sm:$0xff] %v174
        %s176 = sand.u32 %s75, 1
        %s177 = scalar_lea.sflag [#allocation4], %s176
        %s178 = sand.u32 %s75, 1
        %s179 = smul.addr %s178, 8
        %s180 = scalar_lea.vmem [#allocation7], %s179
        // Predicated region
        $region37: #{tpu_custom_call.1} parent=27 // pred_check
          %p181 = pneg %p85
        $region38: #{tpu_custom_call.1} parent=27 // pred_check_branch
          %183 = sbr.rel (%p181) target = $region40
        $region39: #{tpu_custom_call.1} parent=27 // pred_region
          %s185 = ssub.s32 128, 128
          %186 = vsyncadd %s177, %s185
          %s187 = smul.addr %s20, 128
          %s188 = scalar_lea.hbm %s2, %s187
          %s190 = sshll.u32 %s180, 4
          %s191 = int_to_ptr.vmem [resolvable:$true] %s190
          %193 = dma.vmem_to_hbm [thread:$0]  %s191, 128, %s188, %s177
        $region40: #{tpu_custom_call.1} parent=27 // pred_fallthru
          _
      $region28: #{tpu_custom_call.1} parent=5 // pred_fallthru
        _
      %p194 = scmp.le.s32.totalorder 2, %s15
      // Predicated region
      $region41: #{tpu_custom_call.1} parent=5 // pred_check
        %p195 = pneg %p194
      $region42: #{tpu_custom_call.1} parent=5 // pred_check_branch
        %197 = sbr.rel (%p195) target = $region44
      $region43: #{tpu_custom_call.1} parent=5 // pred_region
        %s198 = ssub.s32 %s15, 2
        // Predicated region
        $region45: #{tpu_custom_call.1} parent=43 // pred_check
          %p199 = pneg %p91
        $region46: #{tpu_custom_call.1} parent=43 // pred_check_branch
          %201 = sbr.rel (%p199) target = $region48
        $region47: #{tpu_custom_call.1} parent=43 // pred_region
          %s202 = sand.u32 %s76, 1
          %s203 = scalar_lea.sflag [#allocation4], %s202
          %s204 = sand.u32 %s76, 1
          %s205 = smul.addr %s204, 8
          %s206 = scalar_lea.vmem [#allocation7], %s205
          %207 = dma.done %s203, 128
        $region48: #{tpu_custom_call.1} parent=43 // pred_fallthru
          _
      $region44: #{tpu_custom_call.1} parent=5 // pred_fallthru
        _
    $region6: #{tpu_custom_call.1} parent=1 // loop_footer
      %s19 = sadd.s32 1, %s15
    $region7: #{tpu_custom_call.1} parent=1 // loop_footer_branch
      %14 = sbr.rel target = $region3
    $region8: #{tpu_custom_call.1} parent=1 // loop_exit
      _
    %208 = vsyncpa [#allocation3], 1
    %s209 = scalar_lea.sflag [#allocation3], 1
    %210 = vsyncpa %s209, 1
    %211 = vsyncpa [#allocation6], 1
    %s212 = scalar_lea.sflag [#allocation6], 1
    %213 = vsyncpa %s212, 1
    %214 = vsyncpa [#allocation4], 1
    %s215 = scalar_lea.sflag [#allocation4], 1
    %216 = vsyncpa %s215, 1

// kernel: _forward_impl.1
$region0: #{_forward_impl.1}
  #allocation0 [shape = 'u32[]', space=smem, size = 0x4, offset = 0x4, fixed_abs, tag = 'smem constant byte address 0x4 - core index']
  #allocation1 [shape = 'u32[144,128]{1,0:T(1,128)}', space=vmem, size = 0x12000, scoped, tag = 'internal scratch']
  #allocation2 [shape = 'f32[1]{0:T(128)S(6)}', space=smem, size = 0x200, scoped, tag = 'scoped memory for _forward_impl.1']
  %s0 = inlined_call_operand.vmem [shape: f32[300,32], index: 0, kind: input, shape index: {}]
  %s1 = inlined_call_operand.vmem [shape: bf16[32,128], index: 1, kind: input, shape index: {}]
  %s2 = inlined_call_operand.vmem [shape: f32[1,128], index: 2, kind: input, shape index: {}]
  %s3 = inlined_call_operand.vmem [shape: bf16[128,128], index: 3, kind: input, shape index: {}]
  %s4 = inlined_call_operand.vmem [shape: f32[1,128], index: 4, kind: input, shape index: {}]
  %s5 = inlined_call_operand.vmem [shape: bf16[1,128], index: 5, kind: input, shape index: {}]
  %s6 = inlined_call_operand.<no memory space> [shape: f32[1], index: 6, kind: input, shape index: {}]
  %s7 = inlined_call_operand.vmem [shape: f32[1,512], index: 7, kind: output, shape index: {}]
  %s8 = sld [smem:[#allocation0]]
  $region61: #{_forward_impl.1} parent=0
    _
  %s10 = ssub.s32 1, %s8
  %s11 = scalar_select 0, %s10, %s8
  %12 = sst [smem:[#allocation2]] %s6
  loop: start=0, step=1, limit=4
  $region2: #{_forward_impl.1} parent=0 // loop_pre_header
    _
  $region3: #{_forward_impl.1} parent=0 // loop_header
    %s14 = sphi 0, %s18
    %p15 = scmp.ge.s32.totalorder %s14, 4
    %s24 = sphi 0, %s26
    %s27 = sphi 0, %s24
    %s28 = sphi 0, %s27
    %s44 = sphi 0, %s28
    %s48 = sphi 0, %s48
    %s50 = sphi 0, %s48
    %s51 = sphi 0, %s50
    %s65 = sphi 0, %s51
    %s69 = sphi 0, %s69
    %s71 = sphi 0, %s69
    %s72 = sphi 0, %s71
    %s86 = sphi 0, %s72
    %s90 = sphi 0, %s90
    %s92 = sphi 0, %s90
    %s93 = sphi 0, %s92
    %s107 = sphi 0, %s93
    %s111 = sphi 0, %s111
    %s113 = sphi 0, %s111
    %s114 = sphi 0, %s113
    %s128 = sphi 0, %s114
    %s132 = sphi 0, %s132
    %s134 = sphi 0, %s132
    %s135 = sphi 0, %s134
    %s149 = sphi 0, %s135
    %s153 = sphi 0, %s153
    %s155 = sphi 0, %s153
    %s156 = sphi 0, %s155
    %s170 = sphi 0, %s156
    %s176 = sphi 0, %s178
    %s179 = sphi 0, %s176
    %s180 = sphi 0, %s179
    %s196 = sphi 0, %s180
  $region4: #{_forward_impl.1} parent=0 // loop_header_branch
    %17 = sbr.rel (%p15) target = $region8
  $region5: #{_forward_impl.1} parent=0 // loop_body
    %s19 = ssub.s32 %s14, 1
    %s20 = ssub.s32 %s14, 2
    %s21 = sadd.s32 %s14, 1
    %s22 = ssub.s32 %s14, %s21
    %p23 = scmp.eq.s32.totalorder %s22, 0
    %s25 = sadd.s32 %s24, 1
    %s26 = scalar_select %p23, %s24, %s25
    %p29 = pneg %p23
    %p30 = scmp.eq.s32.totalorder %s14, 1
    %p31 = por %p29, %p30
    %p32 = scmp.ne.s32.totalorder %s24, %s27
    %p33 = scmp.eq.s32.totalorder %s14, 0
    %p34 = por %p32, %p33
    %p35 = scmp.ne.s32.totalorder %s24, %s27
    %p36 = scmp.eq.s32.totalorder %s19, 1
    %p37 = por %p35, %p36
    %p38 = scmp.ne.s32.totalorder %s27, %s28
    %p39 = scmp.eq.s32.totalorder %s19, 0
    %p40 = por %p38, %p39
    %p41 = scmp.ne.s32.totalorder %s27, %s28
    %p42 = scmp.eq.s32.totalorder %s20, 1
    %p43 = por %p41, %p42
    %p45 = scmp.ne.s32.totalorder %s28, %s44
    %p46 = scmp.eq.s32.totalorder %s20, 0
    %p47 = por %p45, %p46
    %s49 = sadd.s32 %s48, 1
    %p52 = scmp.eq.s32.totalorder %s14, 1
    %p53 = scmp.ne.s32.totalorder %s48, %s50
    %p54 = scmp.eq.s32.totalorder %s14, 0
    %p55 = por %p53, %p54
    %p56 = scmp.ne.s32.totalorder %s48, %s50
    %p57 = scmp.eq.s32.totalorder %s19, 1
    %p58 = por %p56, %p57
    %p59 = scmp.ne.s32.totalorder %s50, %s51
    %p60 = scmp.eq.s32.totalorder %s19, 0
    %p61 = por %p59, %p60
    %p62 = scmp.ne.s32.totalorder %s50, %s51
    %p63 = scmp.eq.s32.totalorder %s20, 1
    %p64 = por %p62, %p63
    %p66 = scmp.ne.s32.totalorder %s51, %s65
    %p67 = scmp.eq.s32.totalorder %s20, 0
    %p68 = por %p66, %p67
    %s70 = sadd.s32 %s69, 1
    %p73 = scmp.eq.s32.totalorder %s14, 1
    %p74 = scmp.ne.s32.totalorder %s69, %s71
    %p75 = scmp.eq.s32.totalorder %s14, 0
    %p76 = por %p74, %p75
    %p77 = scmp.ne.s32.totalorder %s69, %s71
    %p78 = scmp.eq.s32.totalorder %s19, 1
    %p79 = por %p77, %p78
    %p80 = scmp.ne.s32.totalorder %s71, %s72
    %p81 = scmp.eq.s32.totalorder %s19, 0
    %p82 = por %p80, %p81
    %p83 = scmp.ne.s32.totalorder %s71, %s72
    %p84 = scmp.eq.s32.totalorder %s20, 1
    %p85 = por %p83, %p84
    %p87 = scmp.ne.s32.totalorder %s72, %s86
    %p88 = scmp.eq.s32.totalorder %s20, 0
    %p89 = por %p87, %p88
    %s91 = sadd.s32 %s90, 1
    %p94 = scmp.eq.s32.totalorder %s14, 1
    %p95 = scmp.ne.s32.totalorder %s90, %s92
    %p96 = scmp.eq.s32.totalorder %s14, 0
    %p97 = por %p95, %p96
    %p98 = scmp.ne.s32.totalorder %s90, %s92
    %p99 = scmp.eq.s32.totalorder %s19, 1
    %p100 = por %p98, %p99
    %p101 = scmp.ne.s32.totalorder %s92, %s93
    %p102 = scmp.eq.s32.totalorder %s19, 0
    %p103 = por %p101, %p102
    %p104 = scmp.ne.s32.totalorder %s92, %s93
    %p105 = scmp.eq.s32.totalorder %s20, 1
    %p106 = por %p104, %p105
    %p108 = scmp.ne.s32.totalorder %s93, %s107
    %p109 = scmp.eq.s32.totalorder %s20, 0
    %p110 = por %p108, %p109
    %s112 = sadd.s32 %s111, 1
    %p115 = scmp.eq.s32.totalorder %s14, 1
    %p116 = scmp.ne.s32.totalorder %s111, %s113
    %p117 = scmp.eq.s32.totalorder %s14, 0
    %p118 = por %p116, %p117
    %p119 = scmp.ne.s32.totalorder %s111, %s113
    %p120 = scmp.eq.s32.totalorder %s19, 1
    %p121 = por %p119, %p120
    %p122 = scmp.ne.s32.totalorder %s113, %s114
    %p123 = scmp.eq.s32.totalorder %s19, 0
    %p124 = por %p122, %p123
    %p125 = scmp.ne.s32.totalorder %s113, %s114
    %p126 = scmp.eq.s32.totalorder %s20, 1
    %p127 = por %p125, %p126
    %p129 = scmp.ne.s32.totalorder %s114, %s128
    %p130 = scmp.eq.s32.totalorder %s20, 0
    %p131 = por %p129, %p130
    %s133 = sadd.s32 %s132, 1
    %p136 = scmp.eq.s32.totalorder %s14, 1
    %p137 = scmp.ne.s32.totalorder %s132, %s134
    %p138 = scmp.eq.s32.totalorder %s14, 0
    %p139 = por %p137, %p138
    %p140 = scmp.ne.s32.totalorder %s132, %s134
    %p141 = scmp.eq.s32.totalorder %s19, 1
    %p142 = por %p140, %p141
    %p143 = scmp.ne.s32.totalorder %s134, %s135
    %p144 = scmp.eq.s32.totalorder %s19, 0
    %p145 = por %p143, %p144
    %p146 = scmp.ne.s32.totalorder %s134, %s135
    %p147 = scmp.eq.s32.totalorder %s20, 1
    %p148 = por %p146, %p147
    %p150 = scmp.ne.s32.totalorder %s135, %s149
    %p151 = scmp.eq.s32.totalorder %s20, 0
    %p152 = por %p150, %p151
    %s154 = sadd.s32 %s153, 1
    %p157 = scmp.eq.s32.totalorder %s14, 1
    %p158 = scmp.ne.s32.totalorder %s153, %s155
    %p159 = scmp.eq.s32.totalorder %s14, 0
    %p160 = por %p158, %p159
    %p161 = scmp.ne.s32.totalorder %s153, %s155
    %p162 = scmp.eq.s32.totalorder %s19, 1
    %p163 = por %p161, %p162
    %p164 = scmp.ne.s32.totalorder %s155, %s156
    %p165 = scmp.eq.s32.totalorder %s19, 0
    %p166 = por %p164, %p165
    %p167 = scmp.ne.s32.totalorder %s155, %s156
    %p168 = scmp.eq.s32.totalorder %s20, 1
    %p169 = por %p167, %p168
    %p171 = scmp.ne.s32.totalorder %s156, %s170
    %p172 = scmp.eq.s32.totalorder %s20, 0
    %p173 = por %p171, %p172
    %s174 = ssub.s32 %s14, %s21
    %p175 = scmp.eq.s32.totalorder %s174, 0
    %s177 = sadd.s32 %s176, 1
    %s178 = scalar_select %p175, %s176, %s177
    %p181 = pneg %p175
    %p182 = scmp.eq.s32.totalorder %s14, 1
    %p183 = por %p181, %p182
    %p184 = scmp.ne.s32.totalorder %s176, %s179
    %p185 = scmp.eq.s32.totalorder %s14, 0
    %p186 = por %p184, %p185
    %p187 = scmp.ne.s32.totalorder %s176, %s179
    %p188 = scmp.eq.s32.totalorder %s19, 1
    %p189 = por %p187, %p188
    %p190 = scmp.ne.s32.totalorder %s179, %s180
    %p191 = scmp.eq.s32.totalorder %s19, 0
    %p192 = por %p190, %p191
    %p193 = scmp.ne.s32.totalorder %s179, %s180
    %p194 = scmp.eq.s32.totalorder %s20, 1
    %p195 = por %p193, %p194
    %p197 = scmp.ne.s32.totalorder %s180, %s196
    %p198 = scmp.eq.s32.totalorder %s20, 0
    %p199 = por %p197, %p198
    %p200 = scmp.le.s32.totalorder 1, %s14
    %p201 = scmp.lt.s32.totalorder %s14, 3
    %p202 = pnand %p200, %p201
    %p203 = pneg %p202
    // Predicated region
    $region9: #{_forward_impl.1} parent=5 // pred_check
      _
    $region10: #{_forward_impl.1} parent=5 // pred_check_branch
      %205 = sbr.rel (%p202) target = $region12
    $region11: #{_forward_impl.1} parent=5 // pred_region
      %s206 = ssub.s32 %s14, 1
      // Predicated region
      $region13: #{_forward_impl.1} parent=11 // pred_check
        %p207 = pneg %p61
      $region14: #{_forward_impl.1} parent=11 // pred_check_branch
        %209 = sbr.rel (%p207) target = $region16
      $region15: #{_forward_impl.1} parent=11 // pred_region
        _
      $region16: #{_forward_impl.1} parent=11 // pred_fallthru
        _
      // Predicated region
      $region17: #{_forward_impl.1} parent=11 // pred_check
        %p210 = pneg %p82
      $region18: #{_forward_impl.1} parent=11 // pred_check_branch
        %212 = sbr.rel (%p210) target = $region20
      $region19: #{_forward_impl.1} parent=11 // pred_region
        _
      $region20: #{_forward_impl.1} parent=11 // pred_fallthru
        _
      // Predicated region
      $region21: #{_forward_impl.1} parent=11 // pred_check
        %p213 = pneg %p103
      $region22: #{_forward_impl.1} parent=11 // pred_check_branch
        %215 = sbr.rel (%p213) target = $region24
      $region23: #{_forward_impl.1} parent=11 // pred_region
        _
      $region24: #{_forward_impl.1} parent=11 // pred_fallthru
        _
      // Predicated region
      $region25: #{_forward_impl.1} parent=11 // pred_check
        %p216 = pneg %p124
      $region26: #{_forward_impl.1} parent=11 // pred_check_branch
        %218 = sbr.rel (%p216) target = $region28
      $region27: #{_forward_impl.1} parent=11 // pred_region
        _
      $region28: #{_forward_impl.1} parent=11 // pred_fallthru
        _
      // Predicated region
      $region29: #{_forward_impl.1} parent=11 // pred_check
        %p219 = pneg %p145
      $region30: #{_forward_impl.1} parent=11 // pred_check_branch
        %221 = sbr.rel (%p219) target = $region32
      $region31: #{_forward_impl.1} parent=11 // pred_region
        _
      $region32: #{_forward_impl.1} parent=11 // pred_fallthru
        _
      // Predicated region
      $region33: #{_forward_impl.1} parent=11 // pred_check
        %p222 = pneg %p166
      $region34: #{_forward_impl.1} parent=11 // pred_check_branch
        %224 = sbr.rel (%p222) target = $region36
      $region35: #{_forward_impl.1} parent=11 // pred_region
        _
      $region36: #{_forward_impl.1} parent=11 // pred_fallthru
        _
    $region12: #{_forward_impl.1} parent=5 // pred_fallthru
      _
    %p225 = scmp.lt.s32.totalorder %s14, 2
    // Predicated region
    $region37: #{_forward_impl.1} parent=5 // pred_check
      %p226 = pneg %p225
    $region38: #{_forward_impl.1} parent=5 // pred_check_branch
      %228 = sbr.rel (%p226) target = $region40
    $region39: #{_forward_impl.1} parent=5 // pred_region
      // Predicated region
      $region41: #{_forward_impl.1} parent=39 // pred_check
        %p229 = pneg %p34
      $region42: #{_forward_impl.1} parent=39 // pred_check_branch
        %231 = sbr.rel (%p229) target = $region44
      $region43: #{_forward_impl.1} parent=39 // pred_region
        %s232 = smul.u32 32, %s14
        %s233 = ssub.s32 38, %s232
        %p234 = scmp.lt.s32.totalorder %s233, 32
        %s235 = scalar_select %p234, %s233, 32
        %s236 = smul.u32 128, %s235
        %p237 = scmp.lt.s32.totalorder %s232, 37
        %s238 = scalar_select %p237, %s232, 37
        %s239 = smul.addr %s238, 8
        %s240 = scalar_lea.vmem %s0, %s239
        %s241 = smul.u32 32, %s14
        %s242 = ssub.s32 38, %s241
        %p243 = scmp.lt.s32.totalorder %s242, 32
        %s244 = scalar_select %p243, %s242, 32
        %s245 = smul.u32 128, %s244
      $region44: #{_forward_impl.1} parent=39 // pred_fallthru
        _
    $region40: #{_forward_impl.1} parent=5 // pred_fallthru
      _
    %p246 = scmp.le.s32.totalorder 1, %s14
    %p247 = scmp.lt.s32.totalorder %s14, 3
    %p248 = pnand %p246, %p247
    %p249 = pneg %p248
    // Predicated region
    $region45: #{_forward_impl.1} parent=5 // pred_check
      _
    $region46: #{_forward_impl.1} parent=5 // pred_check_branch
      %251 = sbr.rel (%p248) target = $region48
    $region47: #{_forward_impl.1} parent=5 // pred_region
      %s252 = ssub.s32 %s14, 1
      %s253 = smul.u32 32, %s19
      %s254 = ssub.s32 38, %s253
      %p255 = scmp.lt.s32.totalorder %s254, 32
      %s256 = scalar_select %p255, %s254, 32
      %s257 = smul.u32 128, %s256
      %p258 = scmp.lt.s32.totalorder %s253, 37
      %s259 = scalar_select %p258, %s253, 37
      %s260 = smul.addr %s259, 8
      %s261 = scalar_lea.vmem %s0, %s260
      %p262 = pneg %p40
      %p263 = pneg %p37
      %p264 = pneg %p61
      %p265 = pneg %p58
      %p266 = pneg %p82
      %p267 = pneg %p79
      %p268 = pneg %p103
      %p269 = pneg %p100
      %p270 = pneg %p124
      %p271 = pneg %p121
      %p272 = pneg %p145
      %p273 = pneg %p142
      %p274 = pneg %p166
      %p275 = pneg %p163
      %p276 = pneg %p192
      %p277 = pneg %p189
      %s278 = smul.u32 2, %s19
      %p279 = scmp.lt.s32.totalorder %s278, 3
      %s280 = scalar_select %p279, %s278, 3
      %s281 = scalar_lea.vmem %s7, %s280
      %s282 = smul.u32 32, %s19
      %s283 = ssub.s32 38, %s282
      %p284 = scmp.lt.s32.totalorder %s283, 32
      %s285 = scalar_select %p284, %s283, 32
      %s286 = smul.u32 128, %s285
      %p287 = scmp.lt.s32.totalorder %s282, 37
      %s288 = scalar_select %p287, %s282, 37
      %s289 = smul.addr %s288, 8
      %s290 = scalar_lea.vmem %s0, %s289
      %s291 = smul.u32 32, %s19
      %s292 = ssub.s32 38, %s291
      %p293 = scmp.lt.s32.totalorder %s292, 32
      %s294 = scalar_select %p293, %s292, 32
      %s295 = smul.u32 128, %s294
      %s296 = smul.u32 2, %s19
      %p297 = scmp.lt.s32.totalorder %s296, 3
      %s298 = scalar_select %p297, %s296, 3
      %s299 = scalar_lea.vmem %s7, %s298
      %s300 = smul.u32 2, %s19
      %v302 = vld [vmem:[%s290] sm:$0xff]
      %v303 = vld [vmem:[%s290 + $0x8] sm:$0xff]
      %v304 = vld [vmem:[%s290 + $0x10] sm:$0xff]
      %v305 = vld [vmem:[%s290 + $0x18] sm:$0xff]
      %v306 = vld [vmem:[%s290 + $0x20] sm:$0xff]
      %v307 = vld [vmem:[%s290 + $0x28] sm:$0xff]
      %v308 = vld [vmem:[%s290 + $0x30] sm:$0xff]
      %v309 = vld [vmem:[%s290 + $0x38] sm:$0xff]
      %v310 = vld [vmem:[%s290 + $0x40] sm:$0xff]
      %v311 = vld [vmem:[%s290 + $0x48] sm:$0xff]
      %v312 = vld [vmem:[%s290 + $0x50] sm:$0xff]
      %v313 = vld [vmem:[%s290 + $0x58] sm:$0xff]
      %v314 = vld [vmem:[%s290 + $0x60] sm:$0xff]
      %v315 = vld [vmem:[%s290 + $0x68] sm:$0xff]
      %v316 = vld [vmem:[%s290 + $0x70] sm:$0xff]
      %v317 = vld [vmem:[%s290 + $0x78] sm:$0xff]
      %v318 = vld [vmem:[%s290 + $0x80] sm:$0xff]
      %v319 = vld [vmem:[%s290 + $0x88] sm:$0xff]
      %v320 = vld [vmem:[%s290 + $0x90] sm:$0xff]
      %v321 = vld [vmem:[%s290 + $0x98] sm:$0xff]
      %v322 = vld [vmem:[%s290 + $0xa0] sm:$0xff]
      %v323 = vld [vmem:[%s290 + $0xa8] sm:$0xff]
      %v324 = vld [vmem:[%s290 + $0xb0] sm:$0xff]
      %v325 = vld [vmem:[%s290 + $0xb8] sm:$0xff]
      %v326 = vld [vmem:[%s290 + $0xc0] sm:$0xff]
      %v327 = vld [vmem:[%s290 + $0xc8] sm:$0xff]
      %v328 = vld [vmem:[%s290 + $0xd0] sm:$0xff]
      %v329 = vld [vmem:[%s290 + $0xd8] sm:$0xff]
      %v330 = vld [vmem:[%s290 + $0xe0] sm:$0xff]
      %v331 = vld [vmem:[%s290 + $0xe8] sm:$0xff]
      %v332 = vld [vmem:[%s290 + $0xf0] sm:$0xff]
      %v333 = vld [vmem:[%s290 + $0xf8] sm:$0xff]
      %v334 = vpack.c.bf16 %v303, %v302
      %v335 = vpack.c.bf16 %v305, %v304
      %v336 = vpack.c.bf16 %v307, %v306
      %v337 = vpack.c.bf16 %v309, %v308
      %v338 = vpack.c.bf16 %v311, %v310
      %v339 = vpack.c.bf16 %v313, %v312
      %v340 = vpack.c.bf16 %v315, %v314
      %v341 = vpack.c.bf16 %v317, %v316
      %v342 = vpack.c.bf16 %v319, %v318
      %v343 = vpack.c.bf16 %v321, %v320
      %v344 = vpack.c.bf16 %v323, %v322
      %v345 = vpack.c.bf16 %v325, %v324
      %v346 = vpack.c.bf16 %v327, %v326
      %v347 = vpack.c.bf16 %v329, %v328
      %v348 = vpack.c.bf16 %v331, %v330
      %v349 = vpack.c.bf16 %v333, %v332
      %v350 = vld [vmem:[%s1] sm:$0xf]
      %v351 = vld [vmem:[%s1 + $0x4] sm:$0xf]
      %v352 = vld [vmem:[%s1 + $0x8] sm:$0xf]
      %v353 = vld [vmem:[%s1 + $0xc] sm:$0xf]
      %v354 = vld [vmem:[%s2] sm:$0x1]
      %v356 = vlaneseq
      %v357 = vshrl.u32 %v356, 7
      %v358 = vsub.s32 0, %v357
      %v359 = vrot.slane %v354, %v358
      %v365 = vunpack.c.l.b16 %v350
      %v366 = vunpack.c.l.b16 %v351
      %v367 = vunpack.c.l.b16 %v352
      %v368 = vunpack.c.l.b16 %v353
      %v369 = vpack.c.b16 %v366, %v365
      %v370 = vpack.c.b16 %v368, %v367
      %vm373 = vcmask 261120
      %v375 = vsel %vm373, %v334, 0
      %v378 = vsel %vm373, %v335, 0
      %v381 = vsel %vm373, %v336, 0
      %v384 = vsel %vm373, %v337, 0
      %v387 = vsel %vm373, %v338, 0
      %v390 = vsel %vm373, %v339, 0
      %v393 = vsel %vm373, %v340, 0
      %v396 = vsel %vm373, %v341, 0
      %v399 = vsel %vm373, %v342, 0
      %v402 = vsel %vm373, %v343, 0
      %v405 = vsel %vm373, %v344, 0
      %v408 = vsel %vm373, %v345, 0
      %v411 = vsel %vm373, %v346, 0
      %v414 = vsel %vm373, %v347, 0
      %v417 = vsel %vm373, %v348, 0
      %v420 = vsel %vm373, %v349, 0
      %422 = vmatprep.subr.bf16.mxu0 0
      %423 = vmatpush1.bf16.msra.mxu0 %v369
      %424 = vmatprep.subr.bf16.mxu0 0
      %425 = vmatpush1.bf16.msra.mxu0 %v370
      %426 = vmatprep.subr.bf16.mxu0 0
      %427 = vmatpush1.bf16.msra.mxu0 0
      %428 = vmatprep.subr.bf16.mxu0 0
      %429 = vmatpush1.bf16.msra.mxu0 0
      %430 = vmatprep.subr.bf16.mxu0 0
      %431 = vmatpush1.bf16.msra.mxu0 0
      %432 = vmatprep.subr.bf16.mxu0 0
      %433 = vmatpush1.bf16.msra.mxu0 0
      %434 = vmatprep.subr.bf16.mxu0 0
      %435 = vmatpush1.bf16.msra.mxu0 0
      %436 = vmatprep.subr.bf16.mxu0 0
      %437 = vmatpush1.bf16.msra.mxu0 0
      %438 = vmatprep.subr.bf16.mxu0 0
      %439 = vmatpush1.bf16.msra.mxu0 0
      %440 = vmatprep.subr.bf16.mxu0 0
      %441 = vmatpush1.bf16.msra.mxu0 0
      %442 = vmatprep.subr.bf16.mxu0 0
      %443 = vmatpush1.bf16.msra.mxu0 0
      %444 = vmatprep.subr.bf16.mxu0 0
      %445 = vmatpush1.bf16.msra.mxu0 0
      %446 = vmatprep.subr.bf16.mxu0 0
      %447 = vmatpush1.bf16.msra.mxu0 0
      %448 = vmatprep.subr.bf16.mxu0 0
      %449 = vmatpush1.bf16.msra.mxu0 0
      %450 = vmatprep.subr.bf16.mxu0 0
      %451 = vmatpush1.bf16.msra.mxu0 0
      %452 = vmatprep.subr.bf16.mxu0 0
      %453 = vmatpush1.bf16.msra.mxu0 0
      %454 = vmatprep.mubr.bf16.mxu0 0
      %455 = vmatmul.mubr.bf16.gmra.mrb[0].mxu0 %v375
      %v456 = vpop.f32.mrb[0].mxu0
      %v457 = vadd.f32 %v359, %v456
      %v458 = vpop.f32.mrb[0].mxu0
      %v459 = vpop.f32.mrb[0].mxu0
      %v460 = vadd.f32 %v359, %v459
      %v461 = vpop.f32.mrb[0].mxu0
      %462 = vmatprep.mubr.bf16.mxu0 0
      %463 = vmatmul.mubr.bf16.gmra.mrb[0].mxu0 %v378
      %v464 = vpop.f32.mrb[0].mxu0
      %v465 = vadd.f32 %v359, %v464
      %v466 = vpop.f32.mrb[0].mxu0
      %v467 = vpop.f32.mrb[0].mxu0
      %v468 = vadd.f32 %v359, %v467
      %v469 = vpop.f32.mrb[0].mxu0
      %470 = vmatprep.mubr.bf16.mxu0 0
      %471 = vmatmul.mubr.bf16.gmra.mrb[0].mxu0 %v381
      %v472 = vpop.f32.mrb[0].mxu0
      %v473 = vadd.f32 %v359, %v472
      %v474 = vpop.f32.mrb[0].mxu0
      %v475 = vpop.f32.mrb[0].mxu0
      %v476 = vadd.f32 %v359, %v475
      %v477 = vpop.f32.mrb[0].mxu0
      %478 = vmatprep.mubr.bf16.mxu0 0
      %479 = vmatmul.mubr.bf16.gmra.mrb[0].mxu0 %v384
      %v480 = vpop.f32.mrb[0].mxu0
      %v481 = vadd.f32 %v359, %v480
      %v482 = vpop.f32.mrb[0].mxu0
      %v483 = vpop.f32.mrb[0].mxu0
      %v484 = vadd.f32 %v359, %v483
      %v485 = vpop.f32.mrb[0].mxu0
      %486 = vmatprep.mubr.bf16.mxu0 0
      %487 = vmatmul.mubr.bf16.gmra.mrb[0].mxu0 %v387
      %v488 = vpop.f32.mrb[0].mxu0
      %v489 = vadd.f32 %v359, %v488
      %v490 = vpop.f32.mrb[0].mxu0
      %v491 = vpop.f32.mrb[0].mxu0
      %v492 = vadd.f32 %v359, %v491
      %v493 = vpop.f32.mrb[0].mxu0
      %494 = vmatprep.mubr.bf16.mxu0 0
      %495 = vmatmul.mubr.bf16.gmra.mrb[0].mxu0 %v390
      %v496 = vpop.f32.mrb[0].mxu0
      %v497 = vadd.f32 %v359, %v496
      %v498 = vpop.f32.mrb[0].mxu0
      %v499 = vpop.f32.mrb[0].mxu0
      %v500 = vadd.f32 %v359, %v499
      %v501 = vpop.f32.mrb[0].mxu0
      %502 = vmatprep.mubr.bf16.mxu0 0
      %503 = vmatmul.mubr.bf16.gmra.mrb[0].mxu0 %v393
      %v504 = vpop.f32.mrb[0].mxu0
      %v505 = vadd.f32 %v359, %v504
      %v506 = vpop.f32.mrb[0].mxu0
      %v507 = vpop.f32.mrb[0].mxu0
      %v508 = vadd.f32 %v359, %v507
      %v509 = vpop.f32.mrb[0].mxu0
      %510 = vmatprep.mubr.bf16.mxu0 0
      %511 = vmatmul.mubr.bf16.gmra.mrb[0].mxu0 %v396
      %v512 = vpop.f32.mrb[0].mxu0
      %v513 = vadd.f32 %v359, %v512
      %v514 = vpop.f32.mrb[0].mxu0
      %v515 = vpop.f32.mrb[0].mxu0
      %v516 = vadd.f32 %v359, %v515
      %v517 = vpop.f32.mrb[0].mxu0
      %518 = vmatprep.mubr.bf16.mxu0 0
      %519 = vmatmul.mubr.bf16.gmra.mrb[0].mxu0 %v399
      %v520 = vpop.f32.mrb[0].mxu0
      %v521 = vadd.f32 %v359, %v520
      %v522 = vpop.f32.mrb[0].mxu0
      %v523 = vpop.f32.mrb[0].mxu0
      %v524 = vadd.f32 %v359, %v523
      %v525 = vpop.f32.mrb[0].mxu0
      %526 = vmatprep.mubr.bf16.mxu0 0
      %527 = vmatmul.mubr.bf16.gmra.mrb[0].mxu0 %v402
      %v528 = vpop.f32.mrb[0].mxu0
      %v529 = vadd.f32 %v359, %v528
      %v530 = vpop.f32.mrb[0].mxu0
      %v531 = vpop.f32.mrb[0].mxu0
      %v532 = vadd.f32 %v359, %v531
      %v533 = vpop.f32.mrb[0].mxu0
      %534 = vmatprep.mubr.bf16.mxu0 0
      %535 = vmatmul.mubr.bf16.gmra.mrb[0].mxu0 %v405
      %v536 = vpop.f32.mrb[0].mxu0
      %v537 = vadd.f32 %v359, %v536
      %v538 = vpop.f32.mrb[0].mxu0
      %v539 = vpop.f32.mrb[0].mxu0
      %v540 = vadd.f32 %v359, %v539
      %v541 = vpop.f32.mrb[0].mxu0
      %542 = vmatprep.mubr.bf16.mxu0 0
      %543 = vmatmul.mubr.bf16.gmra.mrb[0].mxu0 %v408
      %v544 = vpop.f32.mrb[0].mxu0
      %v545 = vadd.f32 %v359, %v544
      %v546 = vpop.f32.mrb[0].mxu0
      %v547 = vpop.f32.mrb[0].mxu0
      %v548 = vadd.f32 %v359, %v547
      %v549 = vpop.f32.mrb[0].mxu0
      %550 = vmatprep.mubr.bf16.mxu0 0
      %551 = vmatmul.mubr.bf16.gmra.mrb[0].mxu0 %v411
      %v552 = vpop.f32.mrb[0].mxu0
      %v553 = vadd.f32 %v359, %v552
      %v554 = vpop.f32.mrb[0].mxu0
      %v555 = vpop.f32.mrb[0].mxu0
      %v556 = vadd.f32 %v359, %v555
      %v557 = vpop.f32.mrb[0].mxu0
      %558 = vmatprep.mubr.bf16.mxu0 0
      %559 = vmatmul.mubr.bf16.gmra.mrb[0].mxu0 %v414
      %v560 = vpop.f32.mrb[0].mxu0
      %v561 = vadd.f32 %v359, %v560
      %v562 = vpop.f32.mrb[0].mxu0
      %v563 = vpop.f32.mrb[0].mxu0
      %v564 = vadd.f32 %v359, %v563
      %v565 = vpop.f32.mrb[0].mxu0
      %566 = vmatprep.mubr.bf16.mxu0 0
      %567 = vmatmul.mubr.bf16.gmra.mrb[0].mxu0 %v417
      %v568 = vpop.f32.mrb[0].mxu0
      %v569 = vadd.f32 %v359, %v568
      %v570 = vpop.f32.mrb[0].mxu0
      %v571 = vpop.f32.mrb[0].mxu0
      %v572 = vadd.f32 %v359, %v571
      %v573 = vpop.f32.mrb[0].mxu0
      %574 = vmatprep.mubr.bf16.mxu0 0
      %575 = vmatmul.mubr.bf16.gmra.mrb[0].mxu0 %v420
      %v576 = vpop.f32.mrb[0].mxu0
      %v577 = vadd.f32 %v359, %v576
      %v578 = vpop.f32.mrb[0].mxu0
      %v579 = vpop.f32.mrb[0].mxu0
      %v580 = vadd.f32 %v359, %v579
      %v581 = vpop.f32.mrb[0].mxu0
      %582 = vdwg.mxu0
      %v583 = vmax.f32 %v457, 0.0
      %v584 = vmax.f32 %v460, 0.0
      %v585 = vmax.f32 %v465, 0.0
      %v586 = vmax.f32 %v468, 0.0
      %v587 = vmax.f32 %v473, 0.0
      %v588 = vmax.f32 %v476, 0.0
      %v589 = vmax.f32 %v481, 0.0
      %v590 = vmax.f32 %v484, 0.0
      %v591 = vmax.f32 %v489, 0.0
      %v592 = vmax.f32 %v492, 0.0
      %v593 = vmax.f32 %v497, 0.0
      %v594 = vmax.f32 %v500, 0.0
      %v595 = vmax.f32 %v505, 0.0
      %v596 = vmax.f32 %v508, 0.0
      %v597 = vmax.f32 %v513, 0.0
      %v598 = vmax.f32 %v516, 0.0
      %v599 = vmax.f32 %v521, 0.0
      %v600 = vmax.f32 %v524, 0.0
      %v601 = vmax.f32 %v529, 0.0
      %v602 = vmax.f32 %v532, 0.0
      %v603 = vmax.f32 %v537, 0.0
      %v604 = vmax.f32 %v540, 0.0
      %v605 = vmax.f32 %v545, 0.0
      %v606 = vmax.f32 %v548, 0.0
      %v607 = vmax.f32 %v553, 0.0
      %v608 = vmax.f32 %v556, 0.0
      %v609 = vmax.f32 %v561, 0.0
      %v610 = vmax.f32 %v564, 0.0
      %v611 = vmax.f32 %v569, 0.0
      %v612 = vmax.f32 %v572, 0.0
      %v613 = vmax.f32 %v577, 0.0
      %v614 = vmax.f32 %v580, 0.0
      %v615 = vpack.c.bf16 %v584, %v583
      %v616 = vpack.c.bf16 %v586, %v585
      %v617 = vpack.c.bf16 %v588, %v587
      %v618 = vpack.c.bf16 %v590, %v589
      %v619 = vpack.c.bf16 %v592, %v591
      %v620 = vpack.c.bf16 %v594, %v593
      %v621 = vpack.c.bf16 %v596, %v595
      %v622 = vpack.c.bf16 %v598, %v597
      %v623 = vpack.c.bf16 %v600, %v599
      %v624 = vpack.c.bf16 %v602, %v601
      %v625 = vpack.c.bf16 %v604, %v603
      %v626 = vpack.c.bf16 %v606, %v605
      %v627 = vpack.c.bf16 %v608, %v607
      %v628 = vpack.c.bf16 %v610, %v609
      %v629 = vpack.c.bf16 %v612, %v611
      %v630 = vpack.c.bf16 %v614, %v613
      %v631 = vld [vmem:[%s3] sm:$0xf]
      %v632 = vld [vmem:[%s3 + $0x4] sm:$0xf]
      %v633 = vld [vmem:[%s3 + $0x8] sm:$0xf]
      %v634 = vld [vmem:[%s3 + $0xc] sm:$0xf]
      %v635 = vld [vmem:[%s3 + $0x10] sm:$0xf]
      %v636 = vld [vmem:[%s3 + $0x14] sm:$0xf]
      %v637 = vld [vmem:[%s3 + $0x18] sm:$0xf]
      %v638 = vld [vmem:[%s3 + $0x1c] sm:$0xf]
      %v639 = vld [vmem:[%s3 + $0x20] sm:$0xf]
      %v640 = vld [vmem:[%s3 + $0x24] sm:$0xf]
      %v641 = vld [vmem:[%s3 + $0x28] sm:$0xf]
      %v642 = vld [vmem:[%s3 + $0x2c] sm:$0xf]
      %v643 = vld [vmem:[%s3 + $0x30] sm:$0xf]
      %v644 = vld [vmem:[%s3 + $0x34] sm:$0xf]
      %v645 = vld [vmem:[%s3 + $0x38] sm:$0xf]
      %v646 = vld [vmem:[%s3 + $0x3c] sm:$0xf]
      %v647 = vld [vmem:[%s4] sm:$0x1]
      %v649 = vlaneseq
      %v650 = vshrl.u32 %v649, 7
      %v651 = vsub.s32 0, %v650
      %v652 = vrot.slane %v647, %v651
      %v670 = vunpack.c.l.b16 %v631
      %v671 = vunpack.c.l.b16 %v632
      %v672 = vunpack.c.l.b16 %v633
      %v673 = vunpack.c.l.b16 %v634
      %v674 = vunpack.c.l.b16 %v635
      %v675 = vunpack.c.l.b16 %v636
      %v676 = vunpack.c.l.b16 %v637
      %v677 = vunpack.c.l.b16 %v638
      %v678 = vunpack.c.l.b16 %v639
      %v679 = vunpack.c.l.b16 %v640
      %v680 = vunpack.c.l.b16 %v641
      %v681 = vunpack.c.l.b16 %v642
      %v682 = vunpack.c.l.b16 %v643
      %v683 = vunpack.c.l.b16 %v644
      %v684 = vunpack.c.l.b16 %v645
      %v685 = vunpack.c.l.b16 %v646
      %v686 = vpack.c.b16 %v671, %v670
      %v687 = vpack.c.b16 %v673, %v672
      %v688 = vpack.c.b16 %v675, %v674
      %v689 = vpack.c.b16 %v677, %v676
      %v690 = vpack.c.b16 %v679, %v678
      %v691 = vpack.c.b16 %v681, %v680
      %v692 = vpack.c.b16 %v683, %v682
      %v693 = vpack.c.b16 %v685, %v684
      %702 = vmatprep.subr.bf16.mxu0 0
      %703 = vmatpush1.bf16.msra.mxu0 %v686
      %704 = vmatprep.subr.bf16.mxu0 0
      %705 = vmatpush1.bf16.msra.mxu0 %v687
      %706 = vmatprep.subr.bf16.mxu0 0
      %707 = vmatpush1.bf16.msra.mxu0 %v688
      %708 = vmatprep.subr.bf16.mxu0 0
      %709 = vmatpush1.bf16.msra.mxu0 %v689
      %710 = vmatprep.subr.bf16.mxu0 0
      %711 = vmatpush1.bf16.msra.mxu0 %v690
      %712 = vmatprep.subr.bf16.mxu0 0
      %713 = vmatpush1.bf16.msra.mxu0 %v691
      %714 = vmatprep.subr.bf16.mxu0 0
      %715 = vmatpush1.bf16.msra.mxu0 %v692
      %716 = vmatprep.subr.bf16.mxu0 0
      %717 = vmatpush1.bf16.msra.mxu0 %v693
      %718 = vmatprep.subr.bf16.mxu0 0
      %719 = vmatpush1.bf16.msra.mxu0 0
      %720 = vmatprep.subr.bf16.mxu0 0
      %721 = vmatpush1.bf16.msra.mxu0 0
      %722 = vmatprep.subr.bf16.mxu0 0
      %723 = vmatpush1.bf16.msra.mxu0 0
      %724 = vmatprep.subr.bf16.mxu0 0
      %725 = vmatpush1.bf16.msra.mxu0 0
      %726 = vmatprep.subr.bf16.mxu0 0
      %727 = vmatpush1.bf16.msra.mxu0 0
      %728 = vmatprep.subr.bf16.mxu0 0
      %729 = vmatpush1.bf16.msra.mxu0 0
      %730 = vmatprep.subr.bf16.mxu0 0
      %731 = vmatpush1.bf16.msra.mxu0 0
      %732 = vmatprep.subr.bf16.mxu0 0
      %733 = vmatpush1.bf16.msra.mxu0 0
      %734 = vmatprep.mubr.bf16.mxu0 0
      %735 = vmatmul.mubr.bf16.gmra.mrb[0].mxu0 %v615
      %v736 = vpop.f32.mrb[0].mxu0
      %v737 = vadd.f32 %v652, %v736
      %v738 = vpop.f32.mrb[0].mxu0
      %v739 = vpop.f32.mrb[0].mxu0
      %v740 = vadd.f32 %v652, %v739
      %v741 = vpop.f32.mrb[0].mxu0
      %742 = vmatprep.mubr.bf16.mxu0 0
      %743 = vmatmul.mubr.bf16.gmra.mrb[0].mxu0 %v616
      %v744 = vpop.f32.mrb[0].mxu0
      %v745 = vadd.f32 %v652, %v744
      %v746 = vpop.f32.mrb[0].mxu0
      %v747 = vpop.f32.mrb[0].mxu0
      %v748 = vadd.f32 %v652, %v747
      %v749 = vpop.f32.mrb[0].mxu0
      %750 = vmatprep.mubr.bf16.mxu0 0
      %751 = vmatmul.mubr.bf16.gmra.mrb[0].mxu0 %v617
      %v752 = vpop.f32.mrb[0].mxu0
      %v753 = vadd.f32 %v652, %v752
      %v754 = vpop.f32.mrb[0].mxu0
      %v755 = vpop.f32.mrb[0].mxu0
      %v756 = vadd.f32 %v652, %v755
      %v757 = vpop.f32.mrb[0].mxu0
      %758 = vmatprep.mubr.bf16.mxu0 0
      %759 = vmatmul.mubr.bf16.gmra.mrb[0].mxu0 %v618
      %v760 = vpop.f32.mrb[0].mxu0
      %v761 = vadd.f32 %v652, %v760
      %v762 = vpop.f32.mrb[0].mxu0
      %v763 = vpop.f32.mrb[0].mxu0
      %v764 = vadd.f32 %v652, %v763
      %v765 = vpop.f32.mrb[0].mxu0
      %766 = vmatprep.mubr.bf16.mxu0 0
      %767 = vmatmul.mubr.bf16.gmra.mrb[0].mxu0 %v619
      %v768 = vpop.f32.mrb[0].mxu0
      %v769 = vadd.f32 %v652, %v768
      %v770 = vpop.f32.mrb[0].mxu0
      %v771 = vpop.f32.mrb[0].mxu0
      %v772 = vadd.f32 %v652, %v771
      %v773 = vpop.f32.mrb[0].mxu0
      %774 = vmatprep.mubr.bf16.mxu0 0
      %775 = vmatmul.mubr.bf16.gmra.mrb[0].mxu0 %v620
      %v776 = vpop.f32.mrb[0].mxu0
      %v777 = vadd.f32 %v652, %v776
      %v778 = vpop.f32.mrb[0].mxu0
      %v779 = vpop.f32.mrb[0].mxu0
      %v780 = vadd.f32 %v652, %v779
      %v781 = vpop.f32.mrb[0].mxu0
      %782 = vmatprep.mubr.bf16.mxu0 0
      %783 = vmatmul.mubr.bf16.gmra.mrb[0].mxu0 %v621
      %v784 = vpop.f32.mrb[0].mxu0
      %v785 = vadd.f32 %v652, %v784
      %v786 = vpop.f32.mrb[0].mxu0
      %v787 = vpop.f32.mrb[0].mxu0
      %v788 = vadd.f32 %v652, %v787
      %v789 = vpop.f32.mrb[0].mxu0
      %790 = vmatprep.mubr.bf16.mxu0 0
      %791 = vmatmul.mubr.bf16.gmra.mrb[0].mxu0 %v622
      %v792 = vpop.f32.mrb[0].mxu0
      %v793 = vadd.f32 %v652, %v792
      %v794 = vpop.f32.mrb[0].mxu0
      %v795 = vpop.f32.mrb[0].mxu0
      %v796 = vadd.f32 %v652, %v795
      %v797 = vpop.f32.mrb[0].mxu0
      %798 = vmatprep.mubr.bf16.mxu0 0
      %799 = vmatmul.mubr.bf16.gmra.mrb[0].mxu0 %v623
      %v800 = vpop.f32.mrb[0].mxu0
      %v801 = vadd.f32 %v652, %v800
      %v802 = vpop.f32.mrb[0].mxu0
      %v803 = vpop.f32.mrb[0].mxu0
      %v804 = vadd.f32 %v652, %v803
      %v805 = vpop.f32.mrb[0].mxu0
      %806 = vmatprep.mubr.bf16.mxu0 0
      %807 = vmatmul.mubr.bf16.gmra.mrb[0].mxu0 %v624
      %v808 = vpop.f32.mrb[0].mxu0
      %v809 = vadd.f32 %v652, %v808
      %v810 = vpop.f32.mrb[0].mxu0
      %v811 = vpop.f32.mrb[0].mxu0
      %v812 = vadd.f32 %v652, %v811
      %v813 = vpop.f32.mrb[0].mxu0
      %814 = vmatprep.mubr.bf16.mxu0 0
      %815 = vmatmul.mubr.bf16.gmra.mrb[0].mxu0 %v625
      %v816 = vpop.f32.mrb[0].mxu0
      %v817 = vadd.f32 %v652, %v816
      %v818 = vpop.f32.mrb[0].mxu0
      %v819 = vpop.f32.mrb[0].mxu0
      %v820 = vadd.f32 %v652, %v819
      %v821 = vpop.f32.mrb[0].mxu0
      %822 = vmatprep.mubr.bf16.mxu0 0
      %823 = vmatmul.mubr.bf16.gmra.mrb[0].mxu0 %v626
      %v824 = vpop.f32.mrb[0].mxu0
      %v825 = vadd.f32 %v652, %v824
      %v826 = vpop.f32.mrb[0].mxu0
      %v827 = vpop.f32.mrb[0].mxu0
      %v828 = vadd.f32 %v652, %v827
      %v829 = vpop.f32.mrb[0].mxu0
      %830 = vmatprep.mubr.bf16.mxu0 0
      %831 = vmatmul.mubr.bf16.gmra.mrb[0].mxu0 %v627
      %v832 = vpop.f32.mrb[0].mxu0
      %v833 = vadd.f32 %v652, %v832
      %v834 = vpop.f32.mrb[0].mxu0
      %v835 = vpop.f32.mrb[0].mxu0
      %v836 = vadd.f32 %v652, %v835
      %v837 = vpop.f32.mrb[0].mxu0
      %838 = vmatprep.mubr.bf16.mxu0 0
      %839 = vmatmul.mubr.bf16.gmra.mrb[0].mxu0 %v628
      %v840 = vpop.f32.mrb[0].mxu0
      %v841 = vadd.f32 %v652, %v840
      %v842 = vpop.f32.mrb[0].mxu0
      %v843 = vpop.f32.mrb[0].mxu0
      %v844 = vadd.f32 %v652, %v843
      %v845 = vpop.f32.mrb[0].mxu0
      %846 = vmatprep.mubr.bf16.mxu0 0
      %847 = vmatmul.mubr.bf16.gmra.mrb[0].mxu0 %v629
      %v848 = vpop.f32.mrb[0].mxu0
      %v849 = vadd.f32 %v652, %v848
      %v850 = vpop.f32.mrb[0].mxu0
      %v851 = vpop.f32.mrb[0].mxu0
      %v852 = vadd.f32 %v652, %v851
      %v853 = vpop.f32.mrb[0].mxu0
      %854 = vmatprep.mubr.bf16.mxu0 0
      %855 = vmatmul.mubr.bf16.gmra.mrb[0].mxu0 %v630
      %v856 = vpop.f32.mrb[0].mxu0
      %v857 = vadd.f32 %v652, %v856
      %v858 = vpop.f32.mrb[0].mxu0
      %v859 = vpop.f32.mrb[0].mxu0
      %v860 = vadd.f32 %v652, %v859
      %v861 = vpop.f32.mrb[0].mxu0
      %862 = vdwg.mxu0
      %v863 = vmax.f32 %v737, 0.0
      %v864 = vmax.f32 %v740, 0.0
      %v865 = vmax.f32 %v745, 0.0
      %v866 = vmax.f32 %v748, 0.0
      %v867 = vmax.f32 %v753, 0.0
      %v868 = vmax.f32 %v756, 0.0
      %v869 = vmax.f32 %v761, 0.0
      %v870 = vmax.f32 %v764, 0.0
      %v871 = vmax.f32 %v769, 0.0
      %v872 = vmax.f32 %v772, 0.0
      %v873 = vmax.f32 %v777, 0.0
      %v874 = vmax.f32 %v780, 0.0
      %v875 = vmax.f32 %v785, 0.0
      %v876 = vmax.f32 %v788, 0.0
      %v877 = vmax.f32 %v793, 0.0
      %v878 = vmax.f32 %v796, 0.0
      %v879 = vmax.f32 %v801, 0.0
      %v880 = vmax.f32 %v804, 0.0
      %v881 = vmax.f32 %v809, 0.0
      %v882 = vmax.f32 %v812, 0.0
      %v883 = vmax.f32 %v817, 0.0
      %v884 = vmax.f32 %v820, 0.0
      %v885 = vmax.f32 %v825, 0.0
      %v886 = vmax.f32 %v828, 0.0
      %v887 = vmax.f32 %v833, 0.0
      %v888 = vmax.f32 %v836, 0.0
      %v889 = vmax.f32 %v841, 0.0
      %v890 = vmax.f32 %v844, 0.0
      %v891 = vmax.f32 %v849, 0.0
      %v892 = vmax.f32 %v852, 0.0
      %v893 = vmax.f32 %v857, 0.0
      %v894 = vmax.f32 %v860, 0.0
      %v895 = vld [vmem:[%s5] sm:$0x1]
      %v896 = vpack.c.bf16 %v864, %v863
      %v897 = vpack.c.bf16 %v866, %v865
      %v898 = vpack.c.bf16 %v868, %v867
      %v899 = vpack.c.bf16 %v870, %v869
      %v900 = vpack.c.bf16 %v872, %v871
      %v901 = vpack.c.bf16 %v874, %v873
      %v902 = vpack.c.bf16 %v876, %v875
      %v903 = vpack.c.bf16 %v878, %v877
      %v904 = vpack.c.bf16 %v880, %v879
      %v905 = vpack.c.bf16 %v882, %v881
      %v906 = vpack.c.bf16 %v884, %v883
      %v907 = vpack.c.bf16 %v886, %v885
      %v908 = vpack.c.bf16 %v888, %v887
      %v909 = vpack.c.bf16 %v890, %v889
      %v910 = vpack.c.bf16 %v892, %v891
      %v911 = vpack.c.bf16 %v894, %v893
      %s912 = sld [smem:[#allocation2]]
      %v913 = vstv %s912
      %914 = vmatprep.subr.bf16.mxu0 0
      %915 = vmatpush1.bf16.xpose.msra.mxu0 %v896
      %916 = vmatprep.subr.bf16.mxu0 0
      %917 = vmatpush1.bf16.xpose.msra.mxu0 %v897
      %918 = vmatprep.subr.bf16.mxu0 0
      %919 = vmatpush1.bf16.xpose.msra.mxu0 %v898
      %920 = vmatprep.subr.bf16.mxu0 0
      %921 = vmatpush1.bf16.xpose.msra.mxu0 %v899
      %922 = vmatprep.subr.bf16.mxu0 0
      %923 = vmatpush1.bf16.xpose.msra.mxu0 %v900
      %924 = vmatprep.subr.bf16.mxu0 0
      %925 = vmatpush1.bf16.xpose.msra.mxu0 %v901
      %926 = vmatprep.subr.bf16.mxu0 0
      %927 = vmatpush1.bf16.xpose.msra.mxu0 %v902
      %928 = vmatprep.subr.bf16.mxu0 0
      %929 = vmatpush1.bf16.xpose.msra.mxu0 %v903
      %930 = vmatprep.subr.bf16.mxu0 0
      %931 = vmatpush1.bf16.xpose.msra.mxu0 %v904
      %932 = vmatprep.subr.bf16.mxu0 0
      %933 = vmatpush1.bf16.xpose.msra.mxu0 %v905
      %934 = vmatprep.subr.bf16.mxu0 0
      %935 = vmatpush1.bf16.xpose.msra.mxu0 %v906
      %936 = vmatprep.subr.bf16.mxu0 0
      %937 = vmatpush1.bf16.xpose.msra.mxu0 %v907
      %938 = vmatprep.subr.bf16.mxu0 0
      %939 = vmatpush1.bf16.xpose.msra.mxu0 %v908
      %940 = vmatprep.subr.bf16.mxu0 0
      %941 = vmatpush1.bf16.xpose.msra.mxu0 %v909
      %942 = vmatprep.subr.bf16.mxu0 0
      %943 = vmatpush1.bf16.xpose.msra.mxu0 %v910
      %944 = vmatprep.subr.bf16.mxu0 0
      %945 = vmatpush1.bf16.xpose.msra.mxu0 %v911
      %946 = vmatprep.mubr.bf16.mxu0 0
      %947 = vmatmul.mubr.bf16.gmra.mrb[0].mxu0 %v895
      %v948 = vpop.f32.mrb[0].mxu0
      %v949 = vadd.f32 %v913, %v948
      %v950 = vpop.f32.mrb[0].mxu0
      %v951 = vadd.f32 %v913, %v950
      %v952 = vpop.f32.mrb[0].mxu0
      %v953 = vpop.f32.mrb[0].mxu0
      %954 = vdwg.mxu0
      %v957 = vcombine.low %v949, %v951
      %v959 = vunpack.c.l.s4 1966171168
      %v960 = vunpack.c.0.s8 %v959
      %v961 = vlaneseq
      %v962 = vshrl.u32 %v961, 7
      %v963 = vsub.s32 %v960, %v962
      %v964 = vrot.slane %v957, %v963
      %v966 = vunpack.c.l.s4 1966171168
      %v967 = vunpack.c.0.s8 %v966
      %v968 = vlaneseq
      %v969 = vshrl.u32 %v968, 7
      %v970 = vsub.s32 %v967, %v969
      %v971 = vrot.slane %v964, %v970
      %v973 = vlaneseq
      %vm974 = vcmp.ge.s32.totalorder %v973, 0
      %vm975 = vcmp.lt.s32.totalorder %v973, 256
      %vm976 = vmand %vm974, %vm975
      %977 = vst.msk [vmem:[%s299] sm:$0x3] %vm976, %v971
      %s978 = smul.u32 2, %s19
      %p979 = scmp.lt.s32.totalorder %s978, 3
      %s980 = scalar_select %p979, %s978, 3
      %s981 = scalar_lea.vmem %s7, %s980
      // Predicated region
      $region49: #{_forward_impl.1} parent=47 // pred_check
        %p982 = pneg %p189
      $region50: #{_forward_impl.1} parent=47 // pred_check_branch
        %984 = sbr.rel (%p982) target = $region52
      $region51: #{_forward_impl.1} parent=47 // pred_region
        %s985 = smul.u32 2, %s19
      $region52: #{_forward_impl.1} parent=47 // pred_fallthru
        _
    $region48: #{_forward_impl.1} parent=5 // pred_fallthru
      _
    %p986 = scmp.le.s32.totalorder 2, %s14
    // Predicated region
    $region53: #{_forward_impl.1} parent=5 // pred_check
      %p987 = pneg %p986
    $region54: #{_forward_impl.1} parent=5 // pred_check_branch
      %989 = sbr.rel (%p987) target = $region56
    $region55: #{_forward_impl.1} parent=5 // pred_region
      %s990 = ssub.s32 %s14, 2
      // Predicated region
      $region57: #{_forward_impl.1} parent=55 // pred_check
        %p991 = pneg %p195
      $region58: #{_forward_impl.1} parent=55 // pred_check_branch
        %993 = sbr.rel (%p991) target = $region60
      $region59: #{_forward_impl.1} parent=55 // pred_region
        %s994 = smul.u32 2, %s20
        %p995 = scmp.lt.s32.totalorder %s994, 3
        %s996 = scalar_select %p995, %s994, 3
        %s997 = scalar_lea.vmem %s7, %s996
      $region60: #{_forward_impl.1} parent=55 // pred_fallthru
        _
    $region56: #{_forward_impl.1} parent=5 // pred_fallthru
      _
  $region6: #{_forward_impl.1} parent=0 // loop_footer
    %s18 = sadd.s32 1, %s14
  $region7: #{_forward_impl.1} parent=0 // loop_footer_branch
    %13 = sbr.rel target = $region3
  $region8: #{_forward_impl.1} parent=0 // loop_exit
    _

</llo_original>
